<compile_context>
chip_gen: v7x
topology: tpu7x:2x2x1
jax: 0.10.0
libtpu: 0.0.40
codegen_flags: <defaults>
</compile_context>

<pallas_src>
import functools

import jax
import jax.numpy as jnp
from jax import lax
from jax.experimental import pallas as pl
from jax.experimental.pallas import tpu as pltpu  # noqa: F401  (TPU backend)

_F32 = jnp.float32
_BF16 = jnp.bfloat16


def _full_spec(shape):
    # Whole-array block for a gridless pallas_call (index_map takes no args).
    return pl.BlockSpec(shape, lambda: (0,) * len(shape))


# ----------------------------------------------------------------------------
# Fused 2-layer GCN forward:
#   out = log_softmax( A @ relu(A @ X @ W1 + b1) @ W2 + b2 )
# Emits the post-relu hidden H as residual for the fused backward.
# ----------------------------------------------------------------------------
def _gcn_fwd_kernel(adj_ref, x_ref, w1_ref, b1_ref, w2_ref, b2_ref,
                    logp_ref, h_ref):
    adj = adj_ref[...].astype(_BF16)
    x = x_ref[...].astype(_BF16)
    w1 = w1_ref[...].astype(_BF16)
    w2 = w2_ref[...].astype(_BF16)

    # ---- layer 1: A @ (X @ W1) + b1, relu (bf16 MXU operands, f32 accum) ----
    t1 = lax.dot_general(x, w1, (((1,), (0,)), ((), ())),
                         preferred_element_type=_F32)
    a1 = lax.dot_general(adj, t1.astype(_BF16), (((1,), (0,)), ((), ())),
                         preferred_element_type=_F32) + b1_ref[...]
    h = jnp.maximum(a1, 0.0)
    h_ref[...] = h

    # ---- layer 2: A @ (H @ W2) + b2 ----
    t2 = lax.dot_general(h.astype(_BF16), w2, (((1,), (0,)), ((), ())),
                         preferred_element_type=_F32)
    z = lax.dot_general(adj, t2.astype(_BF16), (((1,), (0,)), ((), ())),
                        preferred_element_type=_F32) + b2_ref[...]

    # ---- numerically stable log_softmax (f32, lane reduction) ----
    zmax = jnp.max(z, axis=-1, keepdims=True)
    ze = z - zmax
    lse = jnp.log(jnp.sum(jnp.exp(ze), axis=-1, keepdims=True))
    logp_ref[...] = ze - lse


def _gcn_fwd_pallas(adj, x, w1, b1, w2, b2):
    n, f = x.shape
    h_dim = w1.shape[1]
    c = w2.shape[1]
    return pl.pallas_call(
        _gcn_fwd_kernel,
        out_shape=(jax.ShapeDtypeStruct((n, c), _F32),      # log_probs
                   jax.ShapeDtypeStruct((n, h_dim), _F32)),  # post-relu hidden
        in_specs=[_full_spec((n, n)), _full_spec((n, f)),
                  _full_spec((f, h_dim)), _full_spec((1, h_dim)),
                  _full_spec((h_dim, c)), _full_spec((1, c))],
        out_specs=(_full_spec((n, c)), _full_spec((n, h_dim))),
    )(adj, x, w1, b1, w2, b2)


# ----------------------------------------------------------------------------
# Fused backward: all parameter gradients in ONE kernel.
# Transposed contractions folded into dot_general dimension_numbers.
# ----------------------------------------------------------------------------
def _gcn_bwd_kernel(adj_ref, x_ref, h_ref, w2_ref, logp_ref, g_ref,
                    dw1_ref, db1_ref, dw2_ref, db2_ref):
    g = g_ref[...]                                   # (N, C) cotangent of log_probs
    p = jnp.exp(logp_ref[...])                       # softmax(z), recomputed
    dz = g - p * jnp.sum(g, axis=-1, keepdims=True)  # log_softmax backward
    db2_ref[...] = jnp.sum(dz, axis=0, keepdims=True)

    adj = adj_ref[...].astype(_BF16)
    x = x_ref[...].astype(_BF16)
    h = h_ref[...]
    w2 = w2_ref[...].astype(_BF16)

    # dT2 = A^T @ dZ    (contract A dim 0 with dZ dim 0)
    dt2 = lax.dot_general(adj, dz.astype(_BF16), (((0,), (0,)), ((), ())),
                          preferred_element_type=_F32)            # (N, C)
    # dW2 = H^T @ dT2
    dw2_ref[...] = lax.dot_general(h.astype(_BF16), dt2.astype(_BF16),
                                   (((0,), (0,)), ((), ())),
                                   preferred_element_type=_F32)   # (H, C)
    # dH = dT2 @ W2^T   (contract dT2 dim 1 with W2 dim 1)
    dh = lax.dot_general(dt2.astype(_BF16), w2, (((1,), (1,)), ((), ())),
                         preferred_element_type=_F32)             # (N, H)
    da1 = jnp.where(h > 0.0, dh, 0.0)                             # relu mask (f32)
    db1_ref[...] = jnp.sum(da1, axis=0, keepdims=True)

    # dT1 = A^T @ dA1
    dt1 = lax.dot_general(adj, da1.astype(_BF16), (((0,), (0,)), ((), ())),
                          preferred_element_type=_F32)            # (N, H)
    # dW1 = X^T @ dT1
    dw1_ref[...] = lax.dot_general(x, dt1.astype(_BF16),
                                   (((0,), (0,)), ((), ())),
                                   preferred_element_type=_F32)   # (F, H)


def _gcn_bwd_pallas(adj, x, h, w2, logp, g):
    n, f = x.shape
    h_dim, c = w2.shape
    return pl.pallas_call(
        _gcn_bwd_kernel,
        out_shape=(jax.ShapeDtypeStruct((f, h_dim), _F32),   # dW1
                   jax.ShapeDtypeStruct((1, h_dim), _F32),   # db1
                   jax.ShapeDtypeStruct((h_dim, c), _F32),   # dW2
                   jax.ShapeDtypeStruct((1, c), _F32)),      # db2
        in_specs=[_full_spec((n, n)), _full_spec((n, f)),
                  _full_spec((n, h_dim)), _full_spec((h_dim, c)),
                  _full_spec((n, c)), _full_spec((n, c))],
        out_specs=(_full_spec((f, h_dim)), _full_spec((1, h_dim)),
                   _full_spec((h_dim, c)), _full_spec((1, c))),
    )(adj, x, h, w2, logp, g)


# ----------------------------------------------------------------------------
# Differentiable fused GCN forward (custom VJP → fused backward kernel).
# ----------------------------------------------------------------------------
@jax.custom_vjp
def gcn_forward(params, adj, features):
    logp, _ = _gcn_fwd_pallas(adj, features, params["w1"], params["b1"],
                              params["w2"], params["b2"])
    return logp


def _gcn_forward_fwd(params, adj, features):
    logp, h = _gcn_fwd_pallas(adj, features, params["w1"], params["b1"],
                              params["w2"], params["b2"])
    return logp, (adj, features, h, params["w2"], logp)


def _gcn_forward_bwd(res, g):
    adj, features, h, w2, logp = res
    dw1, db1, dw2, db2 = _gcn_bwd_pallas(adj, features, h, w2, logp, g)
    dparams = {"w1": dw1, "b1": db1, "w2": dw2, "b2": db2}
    # adj / features are never differentiated; zero cotangents get DCE'd.
    return dparams, jnp.zeros_like(adj), jnp.zeros_like(features)


gcn_forward.defvjp(_gcn_forward_fwd, _gcn_forward_bwd)


# ----------------------------------------------------------------------------
# Loss glue (tiny gather + mean; stays in plain JAX).
# ----------------------------------------------------------------------------
def nll_loss_from_logp(log_probs, idx, labels):
    sel = log_probs[idx]
    picked = jnp.take_along_axis(sel, labels[:, None], axis=-1)[:, 0]
    return -jnp.mean(picked)


# ----------------------------------------------------------------------------
# LocalUpdate_GCN.forward: first-order MAML inner loop + single Adam step.
# Forward passes are shared between the support gradient and the query loss.
# ----------------------------------------------------------------------------
def local_update_gcn_forward(params, features, adj,
                             x_spt_tr, y_spt_tr, x_qry_tr, y_qry_tr,
                             *, lr, meta_lr, weight_decay, local_ep):
    def spt_loss_with_logp(p):
        logp = gcn_forward(p, adj, features)
        return nll_loss_from_logp(logp, x_spt_tr, y_spt_tr), logp

    def qry_loss_with_logp(p):
        logp = gcn_forward(p, adj, features)
        return nll_loss_from_logp(logp, x_qry_tr, y_qry_tr), logp

    spt_vg = jax.value_and_grad(spt_loss_with_logp, has_aux=True)
    qry_vg = jax.value_and_grad(qry_loss_with_logp, has_aux=True)

    sgd = lambda p_, g_: p_ - lr * g_
    losses_q = []

    # --- inner step 0 (original params); forward shared with losses_q[0] ---
    (_, logp0), g = spt_vg(params)
    losses_q.append(nll_loss_from_logp(logp0, x_qry_tr, y_qry_tr))
    fast = jax.tree_util.tree_map(sgd, params, g)

    # --- inner steps 1..local_ep-1; forward at fast_k shared with losses_q[k]
    for _ in range(1, local_ep):
        (_, logpk), g = spt_vg(fast)
        losses_q.append(nll_loss_from_logp(logpk, x_qry_tr, y_qry_tr))
        fast = jax.tree_util.tree_map(sgd, fast, g)

    # --- final query loss + first-order meta gradient ---
    # create_graph=False in torch ⇒ d losses_q[-1]/d params == d losses_q[-1]/d fast
    (qloss_last, _), g_meta = qry_vg(fast)
    losses_q.append(qloss_last)

    # PyTorch Adam, step == 1, betas=(0.9,0.999), eps=1e-8, weight_decay:
    #   g' = g + wd*p ;  p_new = p - meta_lr * g' / (|g'| + eps)
    eps = 1e-8

    def adam1(p_, g_):
        gw = g_ + weight_decay * p_
        return p_ - meta_lr * gw / (jnp.abs(gw) + eps)

    new_params = jax.tree_util.tree_map(adam1, params, g_meta)
    mean_loss = sum(losses_q) / len(losses_q)
    return new_params, mean_loss


# ----------------------------------------------------------------------------
# Driver
# ----------------------------------------------------------------------------
if __name__ == "__main__":
    key = jax.random.PRNGKey(0)
    k_feat, k_adj, k_lab, k_w1, k_w2, k_spt, _ = jax.random.split(key, 7)

    N_NODES, N_FEAT, N_HID, N_CLASS = 32, 16, 32, 8
    N_SPT, N_QRY = 8, 8

    # Node features
    features = jax.random.normal(k_feat, (N_NODES, N_FEAT), dtype=jnp.float32)

    # Dense row-normalized adjacency with self-loops
    a = (jax.random.uniform(k_adj, (N_NODES, N_NODES)) < 0.2).astype(jnp.float32)
    a = jnp.maximum(a, a.T) + jnp.eye(N_NODES, dtype=jnp.float32)
    deg = jnp.sum(a, axis=1, keepdims=True)
    adj = a / deg

    # Labels and support / query node index sets
    labels = jax.random.randint(k_lab, (N_NODES,), 0, N_CLASS)
    perm = jax.random.permutation(k_spt, N_NODES)
    x_spt_tr = perm[:N_SPT]
    x_qry_tr = perm[N_SPT:N_SPT + N_QRY]
    y_spt_tr = labels[x_spt_tr]
    y_qry_tr = labels[x_qry_tr]

    # GCN parameters (biases stored as (1, dim) so they are 2-D for the kernel)
    params = {
        "w1": jax.random.normal(k_w1, (N_FEAT, N_HID), dtype=jnp.float32)
               * (1.0 / jnp.sqrt(N_FEAT)),
        "b1": jnp.zeros((1, N_HID), dtype=jnp.float32),
        "w2": jax.random.normal(k_w2, (N_HID, N_CLASS), dtype=jnp.float32)
               * (1.0 / jnp.sqrt(N_HID)),
        "b2": jnp.zeros((1, N_CLASS), dtype=jnp.float32),
    }

    # Whole local update jitted once (inner hyper-params baked in as statics).
    local_update_jit = jax.jit(functools.partial(
        local_update_gcn_forward,
        lr=0.01, meta_lr=0.001, weight_decay=5e-4, local_ep=3))

    new_params, mean_loss = local_update_jit(
        params, features, adj, x_spt_tr, y_spt_tr, x_qry_tr, y_qry_tr)

    jax.block_until_ready((new_params, mean_loss))
    assert jnp.isfinite(mean_loss)
    print("KERNEL_OK")
</pallas_src>

<mosaic_0001>
module attributes {stable_mosaic.version = 11 : i64} {
  func.func @_gcn_fwd_kernel(%arg0: memref<32x32xf32, #tpu.memory_space<vmem>>, %arg1: memref<32x16xf32, #tpu.memory_space<vmem>>, %arg2: memref<16x32xf32, #tpu.memory_space<vmem>>, %arg3: memref<1x32xf32, #tpu.memory_space<vmem>>, %arg4: memref<32x8xf32, #tpu.memory_space<vmem>>, %arg5: memref<1x8xf32, #tpu.memory_space<vmem>>, %arg6: memref<32x8xf32, #tpu.memory_space<vmem>>, %arg7: memref<32x32xf32, #tpu.memory_space<vmem>>) attributes {dimension_semantics = [], scalar_prefetch = 0 : i64, scratch_operands = 0 : i64, tpu.core_type = #tpu.core_type<tc>} {
    %c0 = arith.constant 0 : index
    %c0_0 = arith.constant 0 : index
    %0 = vector.load %arg0[%c0, %c0_0] : memref<32x32xf32, #tpu.memory_space<vmem>>, vector<32x32xf32>
    %1 = arith.truncf %0 : vector<32x32xf32> to vector<32x32xbf16>
    %c0_1 = arith.constant 0 : index
    %c0_2 = arith.constant 0 : index
    %2 = vector.load %arg1[%c0_1, %c0_2] : memref<32x16xf32, #tpu.memory_space<vmem>>, vector<32x16xf32>
    %3 = arith.truncf %2 : vector<32x16xf32> to vector<32x16xbf16>
    %c0_3 = arith.constant 0 : index
    %c0_4 = arith.constant 0 : index
    %4 = vector.load %arg2[%c0_3, %c0_4] : memref<16x32xf32, #tpu.memory_space<vmem>>, vector<16x32xf32>
    %5 = arith.truncf %4 : vector<16x32xf32> to vector<16x32xbf16>
    %c0_5 = arith.constant 0 : index
    %c0_6 = arith.constant 0 : index
    %6 = vector.load %arg4[%c0_5, %c0_6] : memref<32x8xf32, #tpu.memory_space<vmem>>, vector<32x8xf32>
    %7 = arith.truncf %6 : vector<32x8xf32> to vector<32x8xbf16>
    %cst = arith.constant dense<0.000000e+00> : vector<32x32xf32>
    %8 = tpu.matmul %3, %5, %cst {dimension_numbers = #tpu.dot_dimension_numbers<[1], [0], [0], [1], [0, 0, 1, 1], [], []>} : vector<32x16xbf16>, vector<16x32xbf16>, vector<32x32xf32> -> vector<32x32xf32>
    %9 = arith.truncf %8 : vector<32x32xf32> to vector<32x32xbf16>
    %cst_7 = arith.constant dense<0.000000e+00> : vector<32x32xf32>
    %10 = tpu.matmul %1, %9, %cst_7 {dimension_numbers = #tpu.dot_dimension_numbers<[1], [0], [0], [1], [0, 0, 1, 1], [], []>} : vector<32x32xbf16>, vector<32x32xbf16>, vector<32x32xf32> -> vector<32x32xf32>
    %c0_8 = arith.constant 0 : index
    %c0_9 = arith.constant 0 : index
    %11 = vector.load %arg3[%c0_8, %c0_9] : memref<1x32xf32, #tpu.memory_space<vmem>>, vector<1x32xf32>
    %12 = vector.broadcast %11 : vector<1x32xf32> to vector<32x32xf32>
    %13 = arith.addf %10, %12 : vector<32x32xf32>
    %cst_10 = arith.constant 0.000000e+00 : f32
    %14 = vector.broadcast %cst_10 : f32 to vector<32x32xf32>
    %15 = arith.maximumf %13, %14 : vector<32x32xf32>
    %c0_11 = arith.constant 0 : index
    %c0_12 = arith.constant 0 : index
    %16 = vector.load %arg7[%c0_11, %c0_12] : memref<32x32xf32, #tpu.memory_space<vmem>>, vector<32x32xf32>
    tpu.vector_store %arg7[%c0_11, %c0_12], %15 {strides = array<i32>} : memref<32x32xf32, #tpu.memory_space<vmem>>, vector<32x32xf32>,
    %17 = arith.truncf %15 : vector<32x32xf32> to vector<32x32xbf16>
    %cst_13 = arith.constant dense<0.000000e+00> : vector<32x8xf32>
    %18 = tpu.matmul %17, %7, %cst_13 {dimension_numbers = #tpu.dot_dimension_numbers<[1], [0], [0], [1], [0, 0, 1, 1], [], []>} : vector<32x32xbf16>, vector<32x8xbf16>, vector<32x8xf32> -> vector<32x8xf32>
    %19 = arith.truncf %18 : vector<32x8xf32> to vector<32x8xbf16>
    %cst_14 = arith.constant dense<0.000000e+00> : vector<32x8xf32>
    %20 = tpu.matmul %1, %19, %cst_14 {dimension_numbers = #tpu.dot_dimension_numbers<[1], [0], [0], [1], [0, 0, 1, 1], [], []>} : vector<32x32xbf16>, vector<32x8xbf16>, vector<32x8xf32> -> vector<32x8xf32>
    %c0_15 = arith.constant 0 : index
    %c0_16 = arith.constant 0 : index
    %21 = vector.load %arg5[%c0_15, %c0_16] : memref<1x8xf32, #tpu.memory_space<vmem>>, vector<1x8xf32>
    %22 = vector.broadcast %21 : vector<1x8xf32> to vector<32x8xf32>
    %23 = arith.addf %20, %22 : vector<32x8xf32>
    %cst_17 = arith.constant dense<0xFF800000> : vector<32xf32>
    %24 = vector.multi_reduction <maximumf>, %23, %cst_17 [1] : vector<32x8xf32> to vector<32xf32>
    %25 = vector.shape_cast %24 : vector<32xf32> to vector<32x1xf32>
    %26 = vector.broadcast %25 : vector<32x1xf32> to vector<32x8xf32>
    %27 = arith.subf %23, %26 : vector<32x8xf32>
    %28 = math.exp %27 : vector<32x8xf32>
    %cst_18 = arith.constant dense<0.000000e+00> : vector<32xf32>
    %29 = vector.multi_reduction <add>, %28, %cst_18 [1] : vector<32x8xf32> to vector<32xf32>
    %30 = vector.shape_cast %29 : vector<32xf32> to vector<32x1xf32>
    %31 = math.log %30 : vector<32x1xf32>
    %32 = vector.broadcast %31 : vector<32x1xf32> to vector<32x8xf32>
    %33 = arith.subf %27, %32 : vector<32x8xf32>
    %c0_19 = arith.constant 0 : index
    %c0_20 = arith.constant 0 : index
    %34 = vector.load %arg6[%c0_19, %c0_20] : memref<32x8xf32, #tpu.memory_space<vmem>>, vector<32x8xf32>
    tpu.vector_store %arg6[%c0_19, %c0_20], %33 {strides = array<i32>} : memref<32x8xf32, #tpu.memory_space<vmem>>, vector<32x8xf32>,
    return
  }
}

module attributes {stable_mosaic.version = 11 : i64} {
  func.func @_gcn_bwd_kernel(%arg0: memref<32x32xf32, #tpu.memory_space<vmem>>, %arg1: memref<32x16xf32, #tpu.memory_space<vmem>>, %arg2: memref<32x32xf32, #tpu.memory_space<vmem>>, %arg3: memref<32x8xf32, #tpu.memory_space<vmem>>, %arg4: memref<32x8xf32, #tpu.memory_space<vmem>>, %arg5: memref<32x8xf32, #tpu.memory_space<vmem>>, %arg6: memref<16x32xf32, #tpu.memory_space<vmem>>, %arg7: memref<1x32xf32, #tpu.memory_space<vmem>>, %arg8: memref<32x8xf32, #tpu.memory_space<vmem>>, %arg9: memref<1x8xf32, #tpu.memory_space<vmem>>) attributes {dimension_semantics = [], scalar_prefetch = 0 : i64, scratch_operands = 0 : i64, tpu.core_type = #tpu.core_type<tc>} {
    %c0 = arith.constant 0 : index
    %c0_0 = arith.constant 0 : index
    %0 = vector.load %arg5[%c0, %c0_0] : memref<32x8xf32, #tpu.memory_space<vmem>>, vector<32x8xf32>
    %c0_1 = arith.constant 0 : index
    %c0_2 = arith.constant 0 : index
    %1 = vector.load %arg4[%c0_1, %c0_2] : memref<32x8xf32, #tpu.memory_space<vmem>>, vector<32x8xf32>
    %2 = math.exp %1 : vector<32x8xf32>
    %cst = arith.constant dense<0.000000e+00> : vector<32xf32>
    %3 = vector.multi_reduction <add>, %0, %cst [1] : vector<32x8xf32> to vector<32xf32>
    %4 = vector.shape_cast %3 : vector<32xf32> to vector<32x1xf32>
    %5 = vector.broadcast %4 : vector<32x1xf32> to vector<32x8xf32>
    %6 = arith.mulf %2, %5 : vector<32x8xf32>
    %7 = arith.subf %0, %6 : vector<32x8xf32>
    %cst_3 = arith.constant dense<0.000000e+00> : vector<8xf32>
    %8 = vector.multi_reduction <add>, %7, %cst_3 [0] : vector<32x8xf32> to vector<8xf32>
    %9 = vector.shape_cast %8 : vector<8xf32> to vector<1x8xf32>
    %c0_4 = arith.constant 0 : index
    %c0_5 = arith.constant 0 : index
    %10 = vector.load %arg9[%c0_4, %c0_5] : memref<1x8xf32, #tpu.memory_space<vmem>>, vector<1x8xf32>
    tpu.vector_store %arg9[%c0_4, %c0_5], %9 {strides = array<i32>} : memref<1x8xf32, #tpu.memory_space<vmem>>, vector<1x8xf32>,
    %c0_6 = arith.constant 0 : index
    %c0_7 = arith.constant 0 : index
    %11 = vector.load %arg0[%c0_6, %c0_7] : memref<32x32xf32, #tpu.memory_space<vmem>>, vector<32x32xf32>
    %12 = arith.truncf %11 : vector<32x32xf32> to vector<32x32xbf16>
    %c0_8 = arith.constant 0 : index
    %c0_9 = arith.constant 0 : index
    %13 = vector.load %arg1[%c0_8, %c0_9] : memref<32x16xf32, #tpu.memory_space<vmem>>, vector<32x16xf32>
    %14 = arith.truncf %13 : vector<32x16xf32> to vector<32x16xbf16>
    %c0_10 = arith.constant 0 : index
    %c0_11 = arith.constant 0 : index
    %15 = vector.load %arg2[%c0_10, %c0_11] : memref<32x32xf32, #tpu.memory_space<vmem>>, vector<32x32xf32>
    %c0_12 = arith.constant 0 : index
    %c0_13 = arith.constant 0 : index
    %16 = vector.load %arg3[%c0_12, %c0_13] : memref<32x8xf32, #tpu.memory_space<vmem>>, vector<32x8xf32>
    %17 = arith.truncf %16 : vector<32x8xf32> to vector<32x8xbf16>
    %18 = arith.truncf %7 : vector<32x8xf32> to vector<32x8xbf16>
    %cst_14 = arith.constant dense<0.000000e+00> : vector<32x8xf32>
    %19 = tpu.matmul %12, %18, %cst_14 {dimension_numbers = #tpu.dot_dimension_numbers<[0], [0], [1], [1], [0, 1, 1, 1], [], []>} : vector<32x32xbf16>, vector<32x8xbf16>, vector<32x8xf32> -> vector<32x8xf32>
    %20 = arith.truncf %15 : vector<32x32xf32> to vector<32x32xbf16>
    %21 = arith.truncf %19 : vector<32x8xf32> to vector<32x8xbf16>
    %cst_15 = arith.constant dense<0.000000e+00> : vector<32x8xf32>
    %22 = tpu.matmul %20, %21, %cst_15 {dimension_numbers = #tpu.dot_dimension_numbers<[0], [0], [1], [1], [0, 1, 1, 1], [], []>} : vector<32x32xbf16>, vector<32x8xbf16>, vector<32x8xf32> -> vector<32x8xf32>
    %c0_16 = arith.constant 0 : index
    %c0_17 = arith.constant 0 : index
    %23 = vector.load %arg8[%c0_16, %c0_17] : memref<32x8xf32, #tpu.memory_space<vmem>>, vector<32x8xf32>
    tpu.vector_store %arg8[%c0_16, %c0_17], %22 {strides = array<i32>} : memref<32x8xf32, #tpu.memory_space<vmem>>, vector<32x8xf32>,
    %24 = arith.truncf %19 : vector<32x8xf32> to vector<32x8xbf16>
    %cst_18 = arith.constant dense<0.000000e+00> : vector<32x32xf32>
    %25 = tpu.matmul %24, %17, %cst_18 {dimension_numbers = #tpu.dot_dimension_numbers<[1], [1], [0], [0], [0, 0, 1, 0], [], []>} : vector<32x8xbf16>, vector<32x8xbf16>, vector<32x32xf32> -> vector<32x32xf32>
    %cst_19 = arith.constant 0.000000e+00 : f32
    %26 = vector.broadcast %cst_19 : f32 to vector<32x32xf32>
    %27 = arith.cmpf ogt, %15, %26 : vector<32x32xf32>
    %cst_20 = arith.constant 0.000000e+00 : f32
    %28 = vector.broadcast %cst_20 : f32 to vector<32x32xf32>
    %29 = arith.select %27, %25, %28 : vector<32x32xi1>, vector<32x32xf32>
    %cst_21 = arith.constant dense<0.000000e+00> : vector<32xf32>
    %30 = vector.multi_reduction <add>, %29, %cst_21 [0] : vector<32x32xf32> to vector<32xf32>
    %31 = vector.shape_cast %30 : vector<32xf32> to vector<1x32xf32>
    %c0_22 = arith.constant 0 : index
    %c0_23 = arith.constant 0 : index
    %32 = vector.load %arg7[%c0_22, %c0_23] : memref<1x32xf32, #tpu.memory_space<vmem>>, vector<1x32xf32>
    tpu.vector_store %arg7[%c0_22, %c0_23], %31 {strides = array<i32>} : memref<1x32xf32, #tpu.memory_space<vmem>>, vector<1x32xf32>,
    %33 = arith.truncf %29 : vector<32x32xf32> to vector<32x32xbf16>
    %cst_24 = arith.constant dense<0.000000e+00> : vector<32x32xf32>
    %34 = tpu.matmul %12, %33, %cst_24 {dimension_numbers = #tpu.dot_dimension_numbers<[0], [0], [1], [1], [0, 1, 1, 1], [], []>} : vector<32x32xbf16>, vector<32x32xbf16>, vector<32x32xf32> -> vector<32x32xf32>
    %35 = arith.truncf %34 : vector<32x32xf32> to vector<32x32xbf16>
    %cst_25 = arith.constant dense<0.000000e+00> : vector<16x32xf32>
    %36 = tpu.matmul %14, %35, %cst_25 {dimension_numbers = #tpu.dot_dimension_numbers<[0], [0], [1], [1], [0, 1, 1, 1], [], []>} : vector<32x16xbf16>, vector<32x32xbf16>, vector<16x32xf32> -> vector<16x32xf32>
    %c0_26 = arith.constant 0 : index
    %c0_27 = arith.constant 0 : index
    %37 = vector.load %arg6[%c0_26, %c0_27] : memref<16x32xf32, #tpu.memory_space<vmem>>, vector<16x32xf32>
    tpu.vector_store %arg6[%c0_26, %c0_27], %36 {strides = array<i32>} : memref<16x32xf32, #tpu.memory_space<vmem>>, vector<16x32xf32>,
    return
  }
}

module attributes {stable_mosaic.version = 11 : i64} {
  func.func @_gcn_bwd_kernel(%arg0: memref<32x32xf32, #tpu.memory_space<vmem>>, %arg1: memref<32x16xf32, #tpu.memory_space<vmem>>, %arg2: memref<32x32xf32, #tpu.memory_space<vmem>>, %arg3: memref<32x8xf32, #tpu.memory_space<vmem>>, %arg4: memref<32x8xf32, #tpu.memory_space<vmem>>, %arg5: memref<32x8xf32, #tpu.memory_space<vmem>>, %arg6: memref<16x32xf32, #tpu.memory_space<vmem>>, %arg7: memref<1x32xf32, #tpu.memory_space<vmem>>, %arg8: memref<32x8xf32, #tpu.memory_space<vmem>>, %arg9: memref<1x8xf32, #tpu.memory_space<vmem>>) attributes {dimension_semantics = [], scalar_prefetch = 0 : i64, scratch_operands = 0 : i64, tpu.core_type = #tpu.core_type<tc>} {
    %c0 = arith.constant 0 : index
    %c0_0 = arith.constant 0 : index
    %0 = vector.load %arg5[%c0, %c0_0] : memref<32x8xf32, #tpu.memory_space<vmem>>, vector<32x8xf32>
    %c0_1 = arith.constant 0 : index
    %c0_2 = arith.constant 0 : index
    %1 = vector.load %arg4[%c0_1, %c0_2] : memref<32x8xf32, #tpu.memory_space<vmem>>, vector<32x8xf32>
    %2 = math.exp %1 : vector<32x8xf32>
    %cst = arith.constant dense<0.000000e+00> : vector<32xf32>
    %3 = vector.multi_reduction <add>, %0, %cst [1] : vector<32x8xf32> to vector<32xf32>
    %4 = vector.shape_cast %3 : vector<32xf32> to vector<32x1xf32>
    %5 = vector.broadcast %4 : vector<32x1xf32> to vector<32x8xf32>
    %6 = arith.mulf %2, %5 : vector<32x8xf32>
    %7 = arith.subf %0, %6 : vector<32x8xf32>
    %cst_3 = arith.constant dense<0.000000e+00> : vector<8xf32>
    %8 = vector.multi_reduction <add>, %7, %cst_3 [0] : vector<32x8xf32> to vector<8xf32>
    %9 = vector.shape_cast %8 : vector<8xf32> to vector<1x8xf32>
    %c0_4 = arith.constant 0 : index
    %c0_5 = arith.constant 0 : index
    %10 = vector.load %arg9[%c0_4, %c0_5] : memref<1x8xf32, #tpu.memory_space<vmem>>, vector<1x8xf32>
    tpu.vector_store %arg9[%c0_4, %c0_5], %9 {strides = array<i32>} : memref<1x8xf32, #tpu.memory_space<vmem>>, vector<1x8xf32>,
    %c0_6 = arith.constant 0 : index
    %c0_7 = arith.constant 0 : index
    %11 = vector.load %arg0[%c0_6, %c0_7] : memref<32x32xf32, #tpu.memory_space<vmem>>, vector<32x32xf32>
    %12 = arith.truncf %11 : vector<32x32xf32> to vector<32x32xbf16>
    %c0_8 = arith.constant 0 : index
    %c0_9 = arith.constant 0 : index
    %13 = vector.load %arg1[%c0_8, %c0_9] : memref<32x16xf32, #tpu.memory_space<vmem>>, vector<32x16xf32>
    %14 = arith.truncf %13 : vector<32x16xf32> to vector<32x16xbf16>
    %c0_10 = arith.constant 0 : index
    %c0_11 = arith.constant 0 : index
    %15 = vector.load %arg2[%c0_10, %c0_11] : memref<32x32xf32, #tpu.memory_space<vmem>>, vector<32x32xf32>
    %c0_12 = arith.constant 0 : index
    %c0_13 = arith.constant 0 : index
    %16 = vector.load %arg3[%c0_12, %c0_13] : memref<32x8xf32, #tpu.memory_space<vmem>>, vector<32x8xf32>
    %17 = arith.truncf %16 : vector<32x8xf32> to vector<32x8xbf16>
    %18 = arith.truncf %7 : vector<32x8xf32> to vector<32x8xbf16>
    %cst_14 = arith.constant dense<0.000000e+00> : vector<32x8xf32>
    %19 = tpu.matmul %12, %18, %cst_14 {dimension_numbers = #tpu.dot_dimension_numbers<[0], [0], [1], [1], [0, 1, 1, 1], [], []>} : vector<32x32xbf16>, vector<32x8xbf16>, vector<32x8xf32> -> vector<32x8xf32>
    %20 = arith.truncf %15 : vector<32x32xf32> to vector<32x32xbf16>
    %21 = arith.truncf %19 : vector<32x8xf32> to vector<32x8xbf16>
    %cst_15 = arith.constant dense<0.000000e+00> : vector<32x8xf32>
    %22 = tpu.matmul %20, %21, %cst_15 {dimension_numbers = #tpu.dot_dimension_numbers<[0], [0], [1], [1], [0, 1, 1, 1], [], []>} : vector<32x32xbf16>, vector<32x8xbf16>, vector<32x8xf32> -> vector<32x8xf32>
    %c0_16 = arith.constant 0 : index
    %c0_17 = arith.constant 0 : index
    %23 = vector.load %arg8[%c0_16, %c0_17] : memref<32x8xf32, #tpu.memory_space<vmem>>, vector<32x8xf32>
    tpu.vector_store %arg8[%c0_16, %c0_17], %22 {strides = array<i32>} : memref<32x8xf32, #tpu.memory_space<vmem>>, vector<32x8xf32>,
    %24 = arith.truncf %19 : vector<32x8xf32> to vector<32x8xbf16>
    %cst_18 = arith.constant dense<0.000000e+00> : vector<32x32xf32>
    %25 = tpu.matmul %24, %17, %cst_18 {dimension_numbers = #tpu.dot_dimension_numbers<[1], [1], [0], [0], [0, 0, 1, 0], [], []>} : vector<32x8xbf16>, vector<32x8xbf16>, vector<32x32xf32> -> vector<32x32xf32>
    %cst_19 = arith.constant 0.000000e+00 : f32
    %26 = vector.broadcast %cst_19 : f32 to vector<32x32xf32>
    %27 = arith.cmpf ogt, %15, %26 : vector<32x32xf32>
    %cst_20 = arith.constant 0.000000e+00 : f32
    %28 = vector.broadcast %cst_20 : f32 to vector<32x32xf32>
    %29 = arith.select %27, %25, %28 : vector<32x32xi1>, vector<32x32xf32>
    %cst_21 = arith.constant dense<0.000000e+00> : vector<32xf32>
    %30 = vector.multi_reduction <add>, %29, %cst_21 [0] : vector<32x32xf32> to vector<32xf32>
    %31 = vector.shape_cast %30 : vector<32xf32> to vector<1x32xf32>
    %c0_22 = arith.constant 0 : index
    %c0_23 = arith.constant 0 : index
    %32 = vector.load %arg7[%c0_22, %c0_23] : memref<1x32xf32, #tpu.memory_space<vmem>>, vector<1x32xf32>
    tpu.vector_store %arg7[%c0_22, %c0_23], %31 {strides = array<i32>} : memref<1x32xf32, #tpu.memory_space<vmem>>, vector<1x32xf32>,
    %33 = arith.truncf %29 : vector<32x32xf32> to vector<32x32xbf16>
    %cst_24 = arith.constant dense<0.000000e+00> : vector<32x32xf32>
    %34 = tpu.matmul %12, %33, %cst_24 {dimension_numbers = #tpu.dot_dimension_numbers<[0], [0], [1], [1], [0, 1, 1, 1], [], []>} : vector<32x32xbf16>, vector<32x32xbf16>, vector<32x32xf32> -> vector<32x32xf32>
    %35 = arith.truncf %34 : vector<32x32xf32> to vector<32x32xbf16>
    %cst_25 = arith.constant dense<0.000000e+00> : vector<16x32xf32>
    %36 = tpu.matmul %14, %35, %cst_25 {dimension_numbers = #tpu.dot_dimension_numbers<[0], [0], [1], [1], [0, 1, 1, 1], [], []>} : vector<32x16xbf16>, vector<32x32xbf16>, vector<16x32xf32> -> vector<16x32xf32>
    %c0_26 = arith.constant 0 : index
    %c0_27 = arith.constant 0 : index
    %37 = vector.load %arg6[%c0_26, %c0_27] : memref<16x32xf32, #tpu.memory_space<vmem>>, vector<16x32xf32>
    tpu.vector_store %arg6[%c0_26, %c0_27], %36 {strides = array<i32>} : memref<16x32xf32, #tpu.memory_space<vmem>>, vector<16x32xf32>,
    return
  }
}

module attributes {stable_mosaic.version = 11 : i64} {
  func.func @_gcn_bwd_kernel(%arg0: memref<32x32xf32, #tpu.memory_space<vmem>>, %arg1: memref<32x16xf32, #tpu.memory_space<vmem>>, %arg2: memref<32x32xf32, #tpu.memory_space<vmem>>, %arg3: memref<32x8xf32, #tpu.memory_space<vmem>>, %arg4: memref<32x8xf32, #tpu.memory_space<vmem>>, %arg5: memref<32x8xf32, #tpu.memory_space<vmem>>, %arg6: memref<16x32xf32, #tpu.memory_space<vmem>>, %arg7: memref<1x32xf32, #tpu.memory_space<vmem>>, %arg8: memref<32x8xf32, #tpu.memory_space<vmem>>, %arg9: memref<1x8xf32, #tpu.memory_space<vmem>>) attributes {dimension_semantics = [], scalar_prefetch = 0 : i64, scratch_operands = 0 : i64, tpu.core_type = #tpu.core_type<tc>} {
    %c0 = arith.constant 0 : index
    %c0_0 = arith.constant 0 : index
    %0 = vector.load %arg5[%c0, %c0_0] : memref<32x8xf32, #tpu.memory_space<vmem>>, vector<32x8xf32>
    %c0_1 = arith.constant 0 : index
    %c0_2 = arith.constant 0 : index
    %1 = vector.load %arg4[%c0_1, %c0_2] : memref<32x8xf32, #tpu.memory_space<vmem>>, vector<32x8xf32>
    %2 = math.exp %1 : vector<32x8xf32>
    %cst = arith.constant dense<0.000000e+00> : vector<32xf32>
    %3 = vector.multi_reduction <add>, %0, %cst [1] : vector<32x8xf32> to vector<32xf32>
    %4 = vector.shape_cast %3 : vector<32xf32> to vector<32x1xf32>
    %5 = vector.broadcast %4 : vector<32x1xf32> to vector<32x8xf32>
    %6 = arith.mulf %2, %5 : vector<32x8xf32>
    %7 = arith.subf %0, %6 : vector<32x8xf32>
    %cst_3 = arith.constant dense<0.000000e+00> : vector<8xf32>
    %8 = vector.multi_reduction <add>, %7, %cst_3 [0] : vector<32x8xf32> to vector<8xf32>
    %9 = vector.shape_cast %8 : vector<8xf32> to vector<1x8xf32>
    %c0_4 = arith.constant 0 : index
    %c0_5 = arith.constant 0 : index
    %10 = vector.load %arg9[%c0_4, %c0_5] : memref<1x8xf32, #tpu.memory_space<vmem>>, vector<1x8xf32>
    tpu.vector_store %arg9[%c0_4, %c0_5], %9 {strides = array<i32>} : memref<1x8xf32, #tpu.memory_space<vmem>>, vector<1x8xf32>,
    %c0_6 = arith.constant 0 : index
    %c0_7 = arith.constant 0 : index
    %11 = vector.load %arg0[%c0_6, %c0_7] : memref<32x32xf32, #tpu.memory_space<vmem>>, vector<32x32xf32>
    %12 = arith.truncf %11 : vector<32x32xf32> to vector<32x32xbf16>
    %c0_8 = arith.constant 0 : index
    %c0_9 = arith.constant 0 : index
    %13 = vector.load %arg1[%c0_8, %c0_9] : memref<32x16xf32, #tpu.memory_space<vmem>>, vector<32x16xf32>
    %14 = arith.truncf %13 : vector<32x16xf32> to vector<32x16xbf16>
    %c0_10 = arith.constant 0 : index
    %c0_11 = arith.constant 0 : index
    %15 = vector.load %arg2[%c0_10, %c0_11] : memref<32x32xf32, #tpu.memory_space<vmem>>, vector<32x32xf32>
    %c0_12 = arith.constant 0 : index
    %c0_13 = arith.constant 0 : index
    %16 = vector.load %arg3[%c0_12, %c0_13] : memref<32x8xf32, #tpu.memory_space<vmem>>, vector<32x8xf32>
    %17 = arith.truncf %16 : vector<32x8xf32> to vector<32x8xbf16>
    %18 = arith.truncf %7 : vector<32x8xf32> to vector<32x8xbf16>
    %cst_14 = arith.constant dense<0.000000e+00> : vector<32x8xf32>
    %19 = tpu.matmul %12, %18, %cst_14 {dimension_numbers = #tpu.dot_dimension_numbers<[0], [0], [1], [1], [0, 1, 1, 1], [], []>} : vector<32x32xbf16>, vector<32x8xbf16>, vector<32x8xf32> -> vector<32x8xf32>
    %20 = arith.truncf %15 : vector<32x32xf32> to vector<32x32xbf16>
    %21 = arith.truncf %19 : vector<32x8xf32> to vector<32x8xbf16>
    %cst_15 = arith.constant dense<0.000000e+00> : vector<32x8xf32>
    %22 = tpu.matmul %20, %21, %cst_15 {dimension_numbers = #tpu.dot_dimension_numbers<[0], [0], [1], [1], [0, 1, 1, 1], [], []>} : vector<32x32xbf16>, vector<32x8xbf16>, vector<32x8xf32> -> vector<32x8xf32>
    %c0_16 = arith.constant 0 : index
    %c0_17 = arith.constant 0 : index
    %23 = vector.load %arg8[%c0_16, %c0_17] : memref<32x8xf32, #tpu.memory_space<vmem>>, vector<32x8xf32>
    tpu.vector_store %arg8[%c0_16, %c0_17], %22 {strides = array<i32>} : memref<32x8xf32, #tpu.memory_space<vmem>>, vector<32x8xf32>,
    %24 = arith.truncf %19 : vector<32x8xf32> to vector<32x8xbf16>
    %cst_18 = arith.constant dense<0.000000e+00> : vector<32x32xf32>
    %25 = tpu.matmul %24, %17, %cst_18 {dimension_numbers = #tpu.dot_dimension_numbers<[1], [1], [0], [0], [0, 0, 1, 0], [], []>} : vector<32x8xbf16>, vector<32x8xbf16>, vector<32x32xf32> -> vector<32x32xf32>
    %cst_19 = arith.constant 0.000000e+00 : f32
    %26 = vector.broadcast %cst_19 : f32 to vector<32x32xf32>
    %27 = arith.cmpf ogt, %15, %26 : vector<32x32xf32>
    %cst_20 = arith.constant 0.000000e+00 : f32
    %28 = vector.broadcast %cst_20 : f32 to vector<32x32xf32>
    %29 = arith.select %27, %25, %28 : vector<32x32xi1>, vector<32x32xf32>
    %cst_21 = arith.constant dense<0.000000e+00> : vector<32xf32>
    %30 = vector.multi_reduction <add>, %29, %cst_21 [0] : vector<32x32xf32> to vector<32xf32>
    %31 = vector.shape_cast %30 : vector<32xf32> to vector<1x32xf32>
    %c0_22 = arith.constant 0 : index
    %c0_23 = arith.constant 0 : index
    %32 = vector.load %arg7[%c0_22, %c0_23] : memref<1x32xf32, #tpu.memory_space<vmem>>, vector<1x32xf32>
    tpu.vector_store %arg7[%c0_22, %c0_23], %31 {strides = array<i32>} : memref<1x32xf32, #tpu.memory_space<vmem>>, vector<1x32xf32>,
    %33 = arith.truncf %29 : vector<32x32xf32> to vector<32x32xbf16>
    %cst_24 = arith.constant dense<0.000000e+00> : vector<32x32xf32>
    %34 = tpu.matmul %12, %33, %cst_24 {dimension_numbers = #tpu.dot_dimension_numbers<[0], [0], [1], [1], [0, 1, 1, 1], [], []>} : vector<32x32xbf16>, vector<32x32xbf16>, vector<32x32xf32> -> vector<32x32xf32>
    %35 = arith.truncf %34 : vector<32x32xf32> to vector<32x32xbf16>
    %cst_25 = arith.constant dense<0.000000e+00> : vector<16x32xf32>
    %36 = tpu.matmul %14, %35, %cst_25 {dimension_numbers = #tpu.dot_dimension_numbers<[0], [0], [1], [1], [0, 1, 1, 1], [], []>} : vector<32x16xbf16>, vector<32x32xbf16>, vector<16x32xf32> -> vector<16x32xf32>
    %c0_26 = arith.constant 0 : index
    %c0_27 = arith.constant 0 : index
    %37 = vector.load %arg6[%c0_26, %c0_27] : memref<16x32xf32, #tpu.memory_space<vmem>>, vector<16x32xf32>
    tpu.vector_store %arg6[%c0_26, %c0_27], %36 {strides = array<i32>} : memref<16x32xf32, #tpu.memory_space<vmem>>, vector<16x32xf32>,
    return
  }
}

</mosaic_0001>

<llo_original>
// kernel: jvp__.4
$region0: #{jvp__.4}
  #allocation0 [shape = 'u32[]', space=smem, size = 0x4, offset = 0x4, fixed_abs, tag = 'smem constant byte address 0x4 - core index']
  #allocation1 [shape = 'u32[144,128]{1,0:T(1,128)}', space=vmem, size = 0x12000, scoped, tag = 'internal scratch']
  %s0 = inlined_call_operand.vmem [shape: f32[32,32], index: 0, kind: input, shape index: {}]
  %s1 = inlined_call_operand.vmem [shape: f32[32,16], index: 1, kind: input, shape index: {}]
  %s2 = inlined_call_operand.vmem [shape: f32[16,32], index: 2, kind: input, shape index: {}]
  %s3 = inlined_call_operand.vmem [shape: f32[1,32], index: 3, kind: input, shape index: {}]
  %s4 = inlined_call_operand.vmem [shape: f32[32,8], index: 4, kind: input, shape index: {}]
  %s5 = inlined_call_operand.vmem [shape: f32[1,8], index: 5, kind: input, shape index: {}]
  %s6 = inlined_call_operand.vmem [shape: f32[32,8], index: 6, kind: output, shape index: {0}]
  %s7 = inlined_call_operand.vmem [shape: f32[32,32], index: 7, kind: output, shape index: {1}]
  %8 = xla_tuple %s6, %s7
  %s9 = sld [smem:[#allocation0]]
  $region42: #{jvp__.4} parent=0
    _
  %s11 = ssub.s32 1, %s9
  %s12 = scalar_select 0, %s11, %s9
  // Predicated region
  $region2: #{jvp__.4} parent=0 // pred_check
    _
  $region3: #{jvp__.4} parent=0 // pred_check_branch
    %14 = sbr.rel (0) target = $region5
  $region4: #{jvp__.4} parent=0 // pred_region
    _
  $region5: #{jvp__.4} parent=0 // pred_fallthru
    _
  // Predicated region
  $region6: #{jvp__.4} parent=0 // pred_check
    _
  $region7: #{jvp__.4} parent=0 // pred_check_branch
    %16 = sbr.rel (0) target = $region9
  $region8: #{jvp__.4} parent=0 // pred_region
    _
  $region9: #{jvp__.4} parent=0 // pred_fallthru
    _
  // Predicated region
  $region10: #{jvp__.4} parent=0 // pred_check
    _
  $region11: #{jvp__.4} parent=0 // pred_check_branch
    %18 = sbr.rel (0) target = $region13
  $region12: #{jvp__.4} parent=0 // pred_region
    _
  $region13: #{jvp__.4} parent=0 // pred_fallthru
    _
  // Predicated region
  $region14: #{jvp__.4} parent=0 // pred_check
    _
  $region15: #{jvp__.4} parent=0 // pred_check_branch
    %20 = sbr.rel (0) target = $region17
  $region16: #{jvp__.4} parent=0 // pred_region
    _
  $region17: #{jvp__.4} parent=0 // pred_fallthru
    _
  // Predicated region
  $region18: #{jvp__.4} parent=0 // pred_check
    _
  $region19: #{jvp__.4} parent=0 // pred_check_branch
    %22 = sbr.rel (0) target = $region21
  $region20: #{jvp__.4} parent=0 // pred_region
    _
  $region21: #{jvp__.4} parent=0 // pred_fallthru
    _
  // Predicated region
  $region22: #{jvp__.4} parent=0 // pred_check
    _
  $region23: #{jvp__.4} parent=0 // pred_check_branch
    %24 = sbr.rel (0) target = $region25
  $region24: #{jvp__.4} parent=0 // pred_region
    _
  $region25: #{jvp__.4} parent=0 // pred_fallthru
    _
  %v26 = vld [vmem:[%s0] sm:$0xff]
  %v27 = vld [vmem:[%s0 + $0x8] sm:$0xff]
  %v28 = vld [vmem:[%s0 + $0x10] sm:$0xff]
  %v29 = vld [vmem:[%s0 + $0x18] sm:$0xff]
  %v30 = vpack.c.bf16 %v27, %v26
  %v31 = vpack.c.bf16 %v29, %v28
  %v32 = vld [vmem:[%s1] sm:$0xff]
  %v33 = vld [vmem:[%s1 + $0x8] sm:$0xff]
  %v34 = vld [vmem:[%s1 + $0x10] sm:$0xff]
  %v35 = vld [vmem:[%s1 + $0x18] sm:$0xff]
  %v36 = vpack.c.bf16 %v33, %v32
  %v37 = vpack.c.bf16 %v35, %v34
  %v38 = vld [vmem:[%s2] sm:$0xff]
  %v39 = vld [vmem:[%s2 + $0x8] sm:$0xff]
  %v40 = vpack.c.bf16 %v39, %v38
  %v41 = vld [vmem:[%s4] sm:$0xff]
  %v42 = vld [vmem:[%s4 + $0x8] sm:$0xff]
  %v43 = vld [vmem:[%s4 + $0x10] sm:$0xff]
  %v44 = vld [vmem:[%s4 + $0x18] sm:$0xff]
  %v45 = vpack.c.bf16 %v42, %v41
  %v46 = vpack.c.bf16 %v44, %v43
  %vm47 = vcmask 130048
  %v49 = vsel %vm47, %v36, 0
  %v52 = vsel %vm47, %v37, 0
  %54 = vmatprep.subr.bf16.mxu0 0
  %55 = vmatpush1.bf16.msra.mxu0 %v40
  %56 = vmatprep.subr.bf16.mxu0 0
  %57 = vmatpush1.bf16.msra.mxu0 0
  %58 = vmatprep.subr.bf16.mxu0 0
  %59 = vmatpush1.bf16.msra.mxu0 0
  %60 = vmatprep.subr.bf16.mxu0 0
  %61 = vmatpush1.bf16.msra.mxu0 0
  %62 = vmatprep.subr.bf16.mxu0 0
  %63 = vmatpush1.bf16.msra.mxu0 0
  %64 = vmatprep.subr.bf16.mxu0 0
  %65 = vmatpush1.bf16.msra.mxu0 0
  %66 = vmatprep.subr.bf16.mxu0 0
  %67 = vmatpush1.bf16.msra.mxu0 0
  %68 = vmatprep.subr.bf16.mxu0 0
  %69 = vmatpush1.bf16.msra.mxu0 0
  %70 = vmatprep.subr.bf16.mxu0 0
  %71 = vmatpush1.bf16.msra.mxu0 0
  %72 = vmatprep.subr.bf16.mxu0 0
  %73 = vmatpush1.bf16.msra.mxu0 0
  %74 = vmatprep.subr.bf16.mxu0 0
  %75 = vmatpush1.bf16.msra.mxu0 0
  %76 = vmatprep.subr.bf16.mxu0 0
  %77 = vmatpush1.bf16.msra.mxu0 0
  %78 = vmatprep.subr.bf16.mxu0 0
  %79 = vmatpush1.bf16.msra.mxu0 0
  %80 = vmatprep.subr.bf16.mxu0 0
  %81 = vmatpush1.bf16.msra.mxu0 0
  %82 = vmatprep.subr.bf16.mxu0 0
  %83 = vmatpush1.bf16.msra.mxu0 0
  %84 = vmatprep.subr.bf16.mxu0 0
  %85 = vmatpush1.bf16.msra.mxu0 0
  %86 = vmatprep.mubr.bf16.mxu0 0
  %87 = vmatmul.mubr.bf16.gmra.mrb[0].mxu0 %v49
  %v88 = vpop.f32.mrb[0].mxu0
  %v89 = vadd.f32 0.0, %v88
  %v90 = vpop.f32.mrb[0].mxu0
  %v91 = vpop.f32.mrb[0].mxu0
  %v92 = vadd.f32 0.0, %v91
  %v93 = vpop.f32.mrb[0].mxu0
  %94 = vmatprep.mubr.bf16.mxu0 0
  %95 = vmatmul.mubr.bf16.gmra.mrb[0].mxu0 %v52
  %v96 = vpop.f32.mrb[0].mxu0
  %v97 = vadd.f32 0.0, %v96
  %v98 = vpop.f32.mrb[0].mxu0
  %v99 = vpop.f32.mrb[0].mxu0
  %v100 = vadd.f32 0.0, %v99
  %v101 = vpop.f32.mrb[0].mxu0
  %102 = vdwg.mxu0
  %v103 = vpack.c.bf16 %v92, %v89
  %v104 = vpack.c.bf16 %v100, %v97
  %v105 = vld [vmem:[%s3] sm:$0x1]
  %v107 = vlaneseq
  %v108 = vshrl.u32 %v107, 7
  %v109 = vsub.s32 0, %v108
  %v110 = vrot.slane %v105, %v109
  %vm112 = vcmask 261120
  %v114 = vsel %vm112, %v30, 0
  %v117 = vsel %vm112, %v31, 0
  %119 = vmatprep.subr.bf16.mxu0 0
  %120 = vmatpush1.bf16.msra.mxu0 %v103
  %121 = vmatprep.subr.bf16.mxu0 0
  %122 = vmatpush1.bf16.msra.mxu0 %v104
  %123 = vmatprep.subr.bf16.mxu0 0
  %124 = vmatpush1.bf16.msra.mxu0 0
  %125 = vmatprep.subr.bf16.mxu0 0
  %126 = vmatpush1.bf16.msra.mxu0 0
  %127 = vmatprep.subr.bf16.mxu0 0
  %128 = vmatpush1.bf16.msra.mxu0 0
  %129 = vmatprep.subr.bf16.mxu0 0
  %130 = vmatpush1.bf16.msra.mxu0 0
  %131 = vmatprep.subr.bf16.mxu0 0
  %132 = vmatpush1.bf16.msra.mxu0 0
  %133 = vmatprep.subr.bf16.mxu0 0
  %134 = vmatpush1.bf16.msra.mxu0 0
  %135 = vmatprep.subr.bf16.mxu0 0
  %136 = vmatpush1.bf16.msra.mxu0 0
  %137 = vmatprep.subr.bf16.mxu0 0
  %138 = vmatpush1.bf16.msra.mxu0 0
  %139 = vmatprep.subr.bf16.mxu0 0
  %140 = vmatpush1.bf16.msra.mxu0 0
  %141 = vmatprep.subr.bf16.mxu0 0
  %142 = vmatpush1.bf16.msra.mxu0 0
  %143 = vmatprep.subr.bf16.mxu0 0
  %144 = vmatpush1.bf16.msra.mxu0 0
  %145 = vmatprep.subr.bf16.mxu0 0
  %146 = vmatpush1.bf16.msra.mxu0 0
  %147 = vmatprep.subr.bf16.mxu0 0
  %148 = vmatpush1.bf16.msra.mxu0 0
  %149 = vmatprep.subr.bf16.mxu0 0
  %150 = vmatpush1.bf16.msra.mxu0 0
  %151 = vmatprep.mubr.bf16.mxu0 0
  %152 = vmatmul.mubr.bf16.gmra.mrb[0].mxu0 %v114
  %v153 = vpop.f32.mrb[0].mxu0
  %v154 = vadd.f32 %v110, %v153
  %v155 = vpop.f32.mrb[0].mxu0
  %v156 = vpop.f32.mrb[0].mxu0
  %v157 = vadd.f32 %v110, %v156
  %v158 = vpop.f32.mrb[0].mxu0
  %159 = vmatprep.mubr.bf16.mxu0 0
  %160 = vmatmul.mubr.bf16.gmra.mrb[0].mxu0 %v117
  %v161 = vpop.f32.mrb[0].mxu0
  %v162 = vadd.f32 %v110, %v161
  %v163 = vpop.f32.mrb[0].mxu0
  %v164 = vpop.f32.mrb[0].mxu0
  %v165 = vadd.f32 %v110, %v164
  %v166 = vpop.f32.mrb[0].mxu0
  %167 = vdwg.mxu0
  %v168 = vmax.f32 %v154, 0.0
  %v169 = vmax.f32 %v157, 0.0
  %v170 = vmax.f32 %v162, 0.0
  %v171 = vmax.f32 %v165, 0.0
  %172 = vst.msk [vmem:[%s7] sm:$0xff] %vm112, %v168
  %173 = vst.msk [vmem:[%s7 + $0x8] sm:$0xff] %vm112, %v169
  %174 = vst.msk [vmem:[%s7 + $0x10] sm:$0xff] %vm112, %v170
  %175 = vst.msk [vmem:[%s7 + $0x18] sm:$0xff] %vm112, %v171
  %v176 = vpack.c.bf16 %v169, %v168
  %v177 = vpack.c.bf16 %v171, %v170
  %v179 = vsel %vm112, %v176, 0
  %v182 = vsel %vm112, %v177, 0
  %184 = vmatprep.subr.bf16.mxu0 0
  %185 = vmatpush1.bf16.msra.mxu0 %v45
  %186 = vmatprep.subr.bf16.mxu0 0
  %187 = vmatpush1.bf16.msra.mxu0 %v46
  %188 = vmatprep.subr.bf16.mxu0 0
  %189 = vmatpush1.bf16.msra.mxu0 0
  %190 = vmatprep.subr.bf16.mxu0 0
  %191 = vmatpush1.bf16.msra.mxu0 0
  %192 = vmatprep.subr.bf16.mxu0 0
  %193 = vmatpush1.bf16.msra.mxu0 0
  %194 = vmatprep.subr.bf16.mxu0 0
  %195 = vmatpush1.bf16.msra.mxu0 0
  %196 = vmatprep.subr.bf16.mxu0 0
  %197 = vmatpush1.bf16.msra.mxu0 0
  %198 = vmatprep.subr.bf16.mxu0 0
  %199 = vmatpush1.bf16.msra.mxu0 0
  %200 = vmatprep.subr.bf16.mxu0 0
  %201 = vmatpush1.bf16.msra.mxu0 0
  %202 = vmatprep.subr.bf16.mxu0 0
  %203 = vmatpush1.bf16.msra.mxu0 0
  %204 = vmatprep.subr.bf16.mxu0 0
  %205 = vmatpush1.bf16.msra.mxu0 0
  %206 = vmatprep.subr.bf16.mxu0 0
  %207 = vmatpush1.bf16.msra.mxu0 0
  %208 = vmatprep.subr.bf16.mxu0 0
  %209 = vmatpush1.bf16.msra.mxu0 0
  %210 = vmatprep.subr.bf16.mxu0 0
  %211 = vmatpush1.bf16.msra.mxu0 0
  %212 = vmatprep.subr.bf16.mxu0 0
  %213 = vmatpush1.bf16.msra.mxu0 0
  %214 = vmatprep.subr.bf16.mxu0 0
  %215 = vmatpush1.bf16.msra.mxu0 0
  %216 = vmatprep.mubr.bf16.mxu0 0
  %217 = vmatmul.mubr.bf16.gmra.mrb[0].mxu0 %v179
  %v218 = vpop.f32.mrb[0].mxu0
  %v219 = vadd.f32 0.0, %v218
  %v220 = vpop.f32.mrb[0].mxu0
  %v221 = vpop.f32.mrb[0].mxu0
  %v222 = vadd.f32 0.0, %v221
  %v223 = vpop.f32.mrb[0].mxu0
  %224 = vmatprep.mubr.bf16.mxu0 0
  %225 = vmatmul.mubr.bf16.gmra.mrb[0].mxu0 %v182
  %v226 = vpop.f32.mrb[0].mxu0
  %v227 = vadd.f32 0.0, %v226
  %v228 = vpop.f32.mrb[0].mxu0
  %v229 = vpop.f32.mrb[0].mxu0
  %v230 = vadd.f32 0.0, %v229
  %v231 = vpop.f32.mrb[0].mxu0
  %232 = vdwg.mxu0
  %v233 = vpack.c.bf16 %v222, %v219
  %v234 = vpack.c.bf16 %v230, %v227
  %v235 = vld [vmem:[%s5] sm:$0x1]
  %v237 = vlaneseq
  %v238 = vshrl.u32 %v237, 7
  %v239 = vsub.s32 0, %v238
  %v240 = vrot.slane %v235, %v239
  %242 = vmatprep.subr.bf16.mxu0 0
  %243 = vmatpush1.bf16.msra.mxu0 %v233
  %244 = vmatprep.subr.bf16.mxu0 0
  %245 = vmatpush1.bf16.msra.mxu0 %v234
  %246 = vmatprep.subr.bf16.mxu0 0
  %247 = vmatpush1.bf16.msra.mxu0 0
  %248 = vmatprep.subr.bf16.mxu0 0
  %249 = vmatpush1.bf16.msra.mxu0 0
  %250 = vmatprep.subr.bf16.mxu0 0
  %251 = vmatpush1.bf16.msra.mxu0 0
  %252 = vmatprep.subr.bf16.mxu0 0
  %253 = vmatpush1.bf16.msra.mxu0 0
  %254 = vmatprep.subr.bf16.mxu0 0
  %255 = vmatpush1.bf16.msra.mxu0 0
  %256 = vmatprep.subr.bf16.mxu0 0
  %257 = vmatpush1.bf16.msra.mxu0 0
  %258 = vmatprep.subr.bf16.mxu0 0
  %259 = vmatpush1.bf16.msra.mxu0 0
  %260 = vmatprep.subr.bf16.mxu0 0
  %261 = vmatpush1.bf16.msra.mxu0 0
  %262 = vmatprep.subr.bf16.mxu0 0
  %263 = vmatpush1.bf16.msra.mxu0 0
  %264 = vmatprep.subr.bf16.mxu0 0
  %265 = vmatpush1.bf16.msra.mxu0 0
  %266 = vmatprep.subr.bf16.mxu0 0
  %267 = vmatpush1.bf16.msra.mxu0 0
  %268 = vmatprep.subr.bf16.mxu0 0
  %269 = vmatpush1.bf16.msra.mxu0 0
  %270 = vmatprep.subr.bf16.mxu0 0
  %271 = vmatpush1.bf16.msra.mxu0 0
  %272 = vmatprep.subr.bf16.mxu0 0
  %273 = vmatpush1.bf16.msra.mxu0 0
  %274 = vmatprep.mubr.bf16.mxu0 0
  %275 = vmatmul.mubr.bf16.gmra.mrb[0].mxu0 %v114
  %v276 = vpop.f32.mrb[0].mxu0
  %v277 = vadd.f32 %v240, %v276
  %v278 = vpop.f32.mrb[0].mxu0
  %v279 = vpop.f32.mrb[0].mxu0
  %v280 = vadd.f32 %v240, %v279
  %v281 = vpop.f32.mrb[0].mxu0
  %282 = vmatprep.mubr.bf16.mxu0 0
  %283 = vmatmul.mubr.bf16.gmra.mrb[0].mxu0 %v117
  %v284 = vpop.f32.mrb[0].mxu0
  %v285 = vadd.f32 %v240, %v284
  %v286 = vpop.f32.mrb[0].mxu0
  %v287 = vpop.f32.mrb[0].mxu0
  %v288 = vadd.f32 %v240, %v287
  %v289 = vpop.f32.mrb[0].mxu0
  %290 = vdwg.mxu0
  %vm291 = vcmask 64512
  %v292 = vsel %vm291, %v277, -inf
  %293 = vmax.xlane.f32.xlu0 %v292
  %v294 = vpop.xlane.xlu0 %293
  %v295 = vsel %vm291, %v280, -inf
  %296 = vmax.xlane.f32.xlu0 %v295
  %v297 = vpop.xlane.xlu0 %296
  %v298 = vsel %vm291, %v285, -inf
  %299 = vmax.xlane.f32.xlu0 %v298
  %v300 = vpop.xlane.xlu0 %299
  %v301 = vsel %vm291, %v288, -inf
  %302 = vmax.xlane.f32.xlu0 %v301
  %v303 = vpop.xlane.xlu0 %302
  %v304 = vsub.f32 %v277, %v294
  %v305 = vsub.f32 %v280, %v297
  %v306 = vsub.f32 %v285, %v300
  %v307 = vsub.f32 %v288, %v303
  %v308 = vmul.f32 %v304, 1.442695
  %v309 = vpow.pop %v308
  %v310 = vmul.f32 %v305, 1.442695
  %v311 = vpow.pop %v310
  %v312 = vmul.f32 %v306, 1.442695
  %v313 = vpow.pop %v312
  %v314 = vmul.f32 %v307, 1.442695
  %v315 = vpow.pop %v314
  %v316 = vsel %vm291, %v309, 0.0
  %317 = vadd.xlane.f32.xlu0 %v316
  %v318 = vpop.xlane.xlu0 %317
  %v319 = vsel %vm291, %v311, 0.0
  %320 = vadd.xlane.f32.xlu0 %v319
  %v321 = vpop.xlane.xlu0 %320
  %v322 = vsel %vm291, %v313, 0.0
  %323 = vadd.xlane.f32.xlu0 %v322
  %v324 = vpop.xlane.xlu0 %323
  %v325 = vsel %vm291, %v315, 0.0
  %326 = vadd.xlane.f32.xlu0 %v325
  %v327 = vpop.xlane.xlu0 %326
  %v328 = vlog2.pop %v318
  %v329 = vmul.f32 %v328, 0.6931472
  %v330 = vlog2.pop %v321
  %v331 = vmul.f32 %v330, 0.6931472
  %v332 = vlog2.pop %v324
  %v333 = vmul.f32 %v332, 0.6931472
  %v334 = vlog2.pop %v327
  %v335 = vmul.f32 %v334, 0.6931472
  %v336 = vsub.f32 %v304, %v329
  %v337 = vsub.f32 %v305, %v331
  %v338 = vsub.f32 %v306, %v333
  %v339 = vsub.f32 %v307, %v335
  %340 = vst.msk [vmem:[%s6] sm:$0xff] %vm291, %v336
  %341 = vst.msk [vmem:[%s6 + $0x8] sm:$0xff] %vm291, %v337
  %342 = vst.msk [vmem:[%s6 + $0x10] sm:$0xff] %vm291, %v338
  %343 = vst.msk [vmem:[%s6 + $0x18] sm:$0xff] %vm291, %v339
  // Predicated region
  $region26: #{jvp__.4} parent=0 // pred_check
    _
  $region27: #{jvp__.4} parent=0 // pred_check_branch
    %345 = sbr.rel (0) target = $region29
  $region28: #{jvp__.4} parent=0 // pred_region
    _
  $region29: #{jvp__.4} parent=0 // pred_fallthru
    _
  // Predicated region
  $region30: #{jvp__.4} parent=0 // pred_check
    _
  $region31: #{jvp__.4} parent=0 // pred_check_branch
    %347 = sbr.rel (0) target = $region33
  $region32: #{jvp__.4} parent=0 // pred_region
    _
  $region33: #{jvp__.4} parent=0 // pred_fallthru
    _
  // Predicated region
  $region34: #{jvp__.4} parent=0 // pred_check
    _
  $region35: #{jvp__.4} parent=0 // pred_check_branch
    %349 = sbr.rel (0) target = $region37
  $region36: #{jvp__.4} parent=0 // pred_region
    _
  $region37: #{jvp__.4} parent=0 // pred_fallthru
    _
  // Predicated region
  $region38: #{jvp__.4} parent=0 // pred_check
    _
  $region39: #{jvp__.4} parent=0 // pred_check_branch
    %351 = sbr.rel (0) target = $region41
  $region40: #{jvp__.4} parent=0 // pred_region
    _
  $region41: #{jvp__.4} parent=0 // pred_fallthru
    _

</llo_original>
